<compile_context>
chip_gen: v5e
topology: v5e:2x2
jax: 0.10.0
libtpu: 0.0.40
codegen_flags: <defaults>
</compile_context>

<pallas_src>
import functools
import math

import jax
import jax.numpy as jnp
from jax.experimental import pallas as pl
from jax.experimental.pallas import tpu as pltpu


# ----------------------------------------------------------------------------
# Deterministic parameter init (mirrors nn.init.orthogonal_ + zero bias)
# ----------------------------------------------------------------------------
def orthogonal_(key, shape, gain=1.0, dtype=jnp.float32):
    """Orthogonal init for a 2-D weight of shape (out, in), PyTorch-style."""
    rows, cols = shape
    flat_rows, flat_cols = (rows, cols) if rows >= cols else (cols, rows)
    a = jax.random.normal(key, (flat_rows, flat_cols), dtype=jnp.float32)
    q, r = jnp.linalg.qr(a)
    d = jnp.sign(jnp.diagonal(r))
    q = q * d[None, :]
    if rows < cols:
        q = q.T
    return (gain * q[:rows, :cols]).astype(dtype)


def init_mlpbase_params(key, num_inputs, hidden_size):
    ks = jax.random.split(key, 5)
    g = math.sqrt(2.0)
    params = {
        # actor
        "wa1": orthogonal_(ks[0], (hidden_size, num_inputs), gain=g),
        "ba1": jnp.zeros((hidden_size,), jnp.float32),
        "wa2": orthogonal_(ks[1], (hidden_size, hidden_size), gain=g),
        "ba2": jnp.zeros((hidden_size,), jnp.float32),
        # critic
        "wc1": orthogonal_(ks[2], (hidden_size, num_inputs), gain=g),
        "bc1": jnp.zeros((hidden_size,), jnp.float32),
        "wc2": orthogonal_(ks[3], (hidden_size, hidden_size), gain=g),
        "bc2": jnp.zeros((hidden_size,), jnp.float32),
        # critic_linear (gain 1.0)
        "wv": orthogonal_(ks[4], (1, hidden_size), gain=1.0),
        "bv": jnp.zeros((1,), jnp.float32),
    }
    return params


# ----------------------------------------------------------------------------
# One-time packing of PyTorch-layout params into the fused kernel layout.
# Actor half lives in lanes [0, H), critic half in lanes [H, 2H).
# ----------------------------------------------------------------------------
def prepare_mlpbase_params(params):
    H, D = params["wa1"].shape
    # layer 1: [D, 2H] = [ wa1.T | wc1.T ]
    w1 = jnp.concatenate([params["wa1"].T, params["wc1"].T], axis=1)
    # layer 2: block-diagonal [2H, 2H]
    w2 = jnp.zeros((2 * H, 2 * H), jnp.float32)
    w2 = w2.at[:H, :H].set(params["wa2"].T)
    w2 = w2.at[H:, H:].set(params["wc2"].T)
    # packed small params: [4, 2H]
    #   row 0: [ba1 | bc1]   row 1: [ba2 | bc2]
    #   row 2: [0..0 | wv]   row 3: [bv, 0, ...]
    b1 = jnp.concatenate([params["ba1"], params["bc1"]])
    b2 = jnp.concatenate([params["ba2"], params["bc2"]])
    wv_row = jnp.concatenate([jnp.zeros((H,), jnp.float32), params["wv"][0]])
    bv_row = jnp.zeros((2 * H,), jnp.float32).at[0].set(params["bv"][0])
    pk = jnp.stack([b1, b2, wv_row, bv_row], axis=0)
    return {"w1": w1, "w2": w2, "pk": pk, "H": int(H), "D": int(D)}


# ----------------------------------------------------------------------------
# Pallas kernel: fused actor+critic towers (128-wide matmuls) + value head,
# writing a single lane-dense [TM, 2H] output tile.
#   out[:, :H]  = hidden_actor
#   out[:, H:]  = value (broadcast across the critic-half lanes)
# ----------------------------------------------------------------------------
def mlpbase_kernel(x_ref, w1_ref, w2_ref, pk_ref, out_ref, *, hidden_size):
    H = hidden_size
    x = x_ref[...]                       # [TM, D]
    b1 = pk_ref[0:1, :]                  # [1, 2H]
    b2 = pk_ref[1:2, :]                  # [1, 2H]
    wv = pk_ref[2:3, :]                  # [1, 2H] (zeros over actor half)
    bv = pk_ref[3:4, 0:1]                # [1, 1]

    # layer 1: one 2H-wide matmul covering both towers
    h1 = jnp.tanh(
        jnp.dot(x, w1_ref[...], preferred_element_type=jnp.float32) + b1)
    # layer 2: block-diagonal weight keeps the towers independent
    h2 = jnp.tanh(
        jnp.dot(h1, w2_ref[...], preferred_element_type=jnp.float32) + b2)

    # value head on the critic half: VPU multiply + lane reduce (zero-padded
    # wv masks out the actor lanes) — avoids a degenerate N=1 MXU matmul.
    value = jnp.sum(h2 * wv, axis=-1, keepdims=True) + bv      # [TM, 1]

    # Pack actor hidden (lanes < H) and value (lanes >= H) into one full-width
    # tile so the store is unmasked / lane-dense.
    lane = jax.lax.broadcasted_iota(jnp.int32, h2.shape, 1)    # [TM, 2H]
    out_ref[...] = jnp.where(lane < H, h2, value)


def _round_up(x, m):
    return ((x + m - 1) // m) * m


@functools.partial(jax.jit, static_argnames=("hidden_size", "batch"))
def _mlpbase_pallas(x, w1, w2, pk, *, hidden_size, batch):
    B = batch
    D = x.shape[1]
    H = hidden_size
    H2 = 2 * H

    # Batch tile: large enough to pipeline / approach the HBM roofline, small
    # enough to stay well inside scoped VMEM even on v7x
    # (TM=1024: x 128 KiB + out 512 KiB per buffer, double buffered ≈ 1.3 MiB).
    TM = min(1024, _round_up(B, 8))
    Bp = _round_up(B, TM)
    if Bp != B:
        x = jnp.pad(x, ((0, Bp - B), (0, 0)))

    out = pl.pallas_call(
        functools.partial(mlpbase_kernel, hidden_size=H),
        out_shape=jax.ShapeDtypeStruct((Bp, H2), jnp.float32),
        grid=(Bp // TM,),
        in_specs=[
            pl.BlockSpec((TM, D), lambda i: (i, 0)),     # x: tiled over batch
            pl.BlockSpec((D, H2), lambda i: (0, 0)),     # w1: resident
            pl.BlockSpec((H2, H2), lambda i: (0, 0)),    # w2: resident
            pl.BlockSpec((4, H2), lambda i: (0, 0)),     # packed biases/wv/bv
        ],
        out_specs=pl.BlockSpec((TM, H2), lambda i: (i, 0)),
        compiler_params=pltpu.CompilerParams(
            dimension_semantics=("parallel",)),
    )(x, w1, w2, pk)

    # Cheap layout plumbing outside the kernel (value is replicated over
    # lanes [H, 2H), so any one column of that half is the value).
    hidden_actor = out[:B, :H]
    value = out[:B, H:H + 1]
    return value, hidden_actor


def mlpbase_forward(prepared, inputs, rnn_hxs, masks):
    """Equivalent of MLPBase.forward (recurrent=False).

    Returns (value [B,1], hidden_actor [B,H], rnn_hxs passthrough).
    """
    del masks  # unused in non-recurrent mode
    value, hidden_actor = _mlpbase_pallas(
        inputs, prepared["w1"], prepared["w2"], prepared["pk"],
        hidden_size=prepared["H"], batch=inputs.shape[0])
    return value, hidden_actor, rnn_hxs


# Pure-JAX reference for verification (PyTorch layout params).
def mlpbase_reference(params, inputs, rnn_hxs, masks):
    del masks
    x = inputs
    hc = jnp.tanh(x @ params["wc1"].T + params["bc1"])
    hc = jnp.tanh(hc @ params["wc2"].T + params["bc2"])
    ha = jnp.tanh(x @ params["wa1"].T + params["ba1"])
    ha = jnp.tanh(ha @ params["wa2"].T + params["ba2"])
    value = hc @ params["wv"].T + params["bv"]
    return value, ha, rnn_hxs


if __name__ == "__main__":
    key = jax.random.PRNGKey(0)
    k_param, k_x1, k_x2 = jax.random.split(key, 3)

    num_inputs = 32   # observation dim
    hidden_size = 64  # MLPBase default

    params = init_mlpbase_params(k_param, num_inputs, hidden_size)
    prepared = prepare_mlpbase_params(params)

    # Case 1: small batch (B=8, exact tile)
    B = 8
    x = jax.random.normal(k_x1, (B, num_inputs), dtype=jnp.float32)
    rnn_hxs = jnp.zeros((B, 1), jnp.float32)   # recurrent_hidden_state_size == 1
    masks = jnp.ones((B, 1), jnp.float32)

    value, hidden_actor, hxs_out = mlpbase_forward(prepared, x, rnn_hxs, masks)
    jax.block_until_ready((value, hidden_actor, hxs_out))

    v_ref, a_ref, _ = mlpbase_reference(params, x, rnn_hxs, masks)
    assert value.shape == (B, 1) and hidden_actor.shape == (B, hidden_size)
    assert jnp.allclose(value, v_ref, atol=2e-5, rtol=1e-5)
    assert jnp.allclose(hidden_actor, a_ref, atol=2e-5, rtol=1e-5)
    assert jnp.array_equal(hxs_out, rnn_hxs)

    # Case 2: batch not a multiple of 8 (exercises the padding path)
    B2 = 50
    x2 = jax.random.normal(k_x2, (B2, num_inputs), dtype=jnp.float32)
    rnn_hxs2 = jnp.zeros((B2, 1), jnp.float32)
    masks2 = jnp.ones((B2, 1), jnp.float32)
    v2, a2, _ = mlpbase_forward(prepared, x2, rnn_hxs2, masks2)
    jax.block_until_ready((v2, a2))
    v2_ref, a2_ref, _ = mlpbase_reference(params, x2, rnn_hxs2, masks2)
    assert v2.shape == (B2, 1) and a2.shape == (B2, hidden_size)
    assert jnp.allclose(v2, v2_ref, atol=2e-5, rtol=1e-5)
    assert jnp.allclose(a2, a2_ref, atol=2e-5, rtol=1e-5)

    print("KERNEL_OK")
</pallas_src>

<mosaic_0001>
module attributes {stable_mosaic.version = 11 : i64} {
  func.func @mlpbase_kernel(%arg0: i32, %arg1: memref<8x32xf32, #tpu.memory_space<vmem>>, %arg2: memref<32x128xf32, #tpu.memory_space<vmem>>, %arg3: memref<128x128xf32, #tpu.memory_space<vmem>>, %arg4: memref<4x128xf32, #tpu.memory_space<vmem>>, %arg5: memref<8x128xf32, #tpu.memory_space<vmem>>) attributes {dimension_semantics = [#tpu.dimension_semantics<parallel>], iteration_bounds = array<i64: 1>, scalar_prefetch = 0 : i64, scratch_operands = 0 : i64, tpu.core_type = #tpu.core_type<tc>, window_params = [{transform_indices = @transform_0, window_bounds = array<i64: 8, 32>}, {pipeline_mode = #tpu.pipeline_mode<synchronous>, transform_indices = @transform_1, window_bounds = array<i64: 32, 128>}, {pipeline_mode = #tpu.pipeline_mode<synchronous>, transform_indices = @transform_2, window_bounds = array<i64: 128, 128>}, {pipeline_mode = #tpu.pipeline_mode<synchronous>, transform_indices = @transform_3, window_bounds = array<i64: 4, 128>}, {transform_indices = @transform_4, window_bounds = array<i64: 8, 128>}]} {
    %c0 = arith.constant 0 : index
    %c0_0 = arith.constant 0 : index
    %0 = vector.load %arg1[%c0, %c0_0] : memref<8x32xf32, #tpu.memory_space<vmem>>, vector<8x32xf32>
    %c0_1 = arith.constant 0 : index
    %c0_2 = arith.constant 0 : index
    %1 = vector.load %arg4[%c0_1, %c0_2] : memref<4x128xf32, #tpu.memory_space<vmem>>, vector<1x128xf32>
    %c1 = arith.constant 1 : index
    %c0_3 = arith.constant 0 : index
    %2 = vector.load %arg4[%c1, %c0_3] : memref<4x128xf32, #tpu.memory_space<vmem>>, vector<1x128xf32>
    %c2 = arith.constant 2 : index
    %c0_4 = arith.constant 0 : index
    %3 = vector.load %arg4[%c2, %c0_4] : memref<4x128xf32, #tpu.memory_space<vmem>>, vector<1x128xf32>
    %c3 = arith.constant 3 : index
    %c0_5 = arith.constant 0 : index
    %4 = vector.load %arg4[%c3, %c0_5] : memref<4x128xf32, #tpu.memory_space<vmem>>, vector<1x1xf32>
    %c0_6 = arith.constant 0 : index
    %c0_7 = arith.constant 0 : index
    %5 = vector.load %arg2[%c0_6, %c0_7] : memref<32x128xf32, #tpu.memory_space<vmem>>, vector<32x128xf32>
    %cst = arith.constant dense<0.000000e+00> : vector<8x128xf32>
    %6 = tpu.matmul %0, %5, %cst {dimension_numbers = #tpu.dot_dimension_numbers<[1], [0], [0], [1], [0, 0, 1, 1], [], []>} : vector<8x32xf32>, vector<32x128xf32>, vector<8x128xf32> -> vector<8x128xf32>
    %7 = vector.broadcast %1 : vector<1x128xf32> to vector<8x128xf32>
    %8 = arith.addf %6, %7 : vector<8x128xf32>
    %9 = math.tanh %8 : vector<8x128xf32>
    %c0_8 = arith.constant 0 : index
    %c0_9 = arith.constant 0 : index
    %10 = vector.load %arg3[%c0_8, %c0_9] : memref<128x128xf32, #tpu.memory_space<vmem>>, vector<128x128xf32>
    %cst_10 = arith.constant dense<0.000000e+00> : vector<8x128xf32>
    %11 = tpu.matmul %9, %10, %cst_10 {dimension_numbers = #tpu.dot_dimension_numbers<[1], [0], [0], [1], [0, 0, 1, 1], [], []>} : vector<8x128xf32>, vector<128x128xf32>, vector<8x128xf32> -> vector<8x128xf32>
    %12 = vector.broadcast %2 : vector<1x128xf32> to vector<8x128xf32>
    %13 = arith.addf %11, %12 : vector<8x128xf32>
    %14 = math.tanh %13 : vector<8x128xf32>
    %15 = vector.broadcast %3 : vector<1x128xf32> to vector<8x128xf32>
    %16 = arith.mulf %14, %15 : vector<8x128xf32>
    %cst_11 = arith.constant dense<0.000000e+00> : vector<8xf32>
    %17 = vector.multi_reduction <add>, %16, %cst_11 [1] : vector<8x128xf32> to vector<8xf32>
    %18 = vector.shape_cast %17 : vector<8xf32> to vector<8x1xf32>
    %19 = vector.broadcast %4 : vector<1x1xf32> to vector<8x1xf32>
    %20 = arith.addf %18, %19 : vector<8x1xf32>
    %21 = tpu.iota {dimensions = array<i32: 1>} : vector<8x128xi32>
    %c64_i32 = arith.constant 64 : i32
    %22 = vector.broadcast %c64_i32 : i32 to vector<8x128xi32>
    %23 = arith.cmpi slt, %21, %22 : vector<8x128xi32>
    %24 = vector.shape_cast %20 : vector<8x1xf32> to vector<8x1xf32>
    %25 = vector.broadcast %24 : vector<8x1xf32> to vector<8x128xf32>
    %26 = arith.select %23, %14, %25 : vector<8x128xi1>, vector<8x128xf32>
    %c0_12 = arith.constant 0 : index
    %c0_13 = arith.constant 0 : index
    %27 = vector.load %arg5[%c0_12, %c0_13] : memref<8x128xf32, #tpu.memory_space<vmem>>, vector<8x128xf32>
    tpu.vector_store %arg5[%c0_12, %c0_13], %26 {strides = array<i32>} : memref<8x128xf32, #tpu.memory_space<vmem>>, vector<8x128xf32>,
    return
  }
  func.func @transform_0(%arg0: i32) -> (i32, i32) {
    %c0_i32 = arith.constant 0 : i32
    %c0_i32_0 = arith.constant 0 : i32
    return %arg0, %c0_i32 : i32, i32
  }
  func.func @transform_1(%arg0: i32) -> (i32, i32) {
    %c0_i32 = arith.constant 0 : i32
    %c0_i32_0 = arith.constant 0 : i32
    %c0_i32_1 = arith.constant 0 : i32
    return %c0_i32, %c0_i32_0 : i32, i32
  }
  func.func @transform_2(%arg0: i32) -> (i32, i32) {
    %c0_i32 = arith.constant 0 : i32
    %c0_i32_0 = arith.constant 0 : i32
    %c0_i32_1 = arith.constant 0 : i32
    return %c0_i32, %c0_i32_0 : i32, i32
  }
  func.func @transform_3(%arg0: i32) -> (i32, i32) {
    %c0_i32 = arith.constant 0 : i32
    %c0_i32_0 = arith.constant 0 : i32
    %c0_i32_1 = arith.constant 0 : i32
    return %c0_i32, %c0_i32_0 : i32, i32
  }
  func.func @transform_4(%arg0: i32) -> (i32, i32) {
    %c0_i32 = arith.constant 0 : i32
    %c0_i32_0 = arith.constant 0 : i32
    return %arg0, %c0_i32 : i32, i32
  }
}

</mosaic_0001>

<llo_original>
// kernel: _mlpbase_pallas.1
$region0: #{_mlpbase_pallas.1}
  #allocation0 [shape = 'u32[]', space=smem, size = 0x4, offset = 0x4, fixed_abs, tag = 'smem constant byte address 0x4 - core index']
  #allocation1 [shape = 'u32[72,128]{1,0:T(1,128)}', space=vmem, size = 0x9000, scoped, tag = 'internal scratch']
  %s0 = inlined_call_operand.hbm [shape: f32[8,32], index: 0, kind: input, shape index: {}]
  %s1 = inlined_call_operand.hbm [shape: f32[32,128], index: 1, kind: input, shape index: {}]
  %s2 = inlined_call_operand.hbm [shape: f32[128,128], index: 2, kind: input, shape index: {}]
  %s3 = inlined_call_operand.hbm [shape: f32[4,128], index: 3, kind: input, shape index: {}]
  %s4 = inlined_call_operand.vmem [shape: f32[8,128], index: 4, kind: output, shape index: {}]
  %s5 = sld [smem:[#allocation0]]
  $region42: #{_mlpbase_pallas.1} parent=0
    _
  %s7 = ssub.s32 1, %s5
  %s8 = scalar_select 0, %s7, %s5
  $region1: #{_mlpbase_pallas.1} parent=0
    #allocation2 [shape = 'u8[4096]{0}', space=vmem, size = 0x1000, scoped, tag = 'input window, operand 0, single buffered']
    #allocation3 [shape = 's32[1]{0}', space=sflag, size = 0x4, scoped, tag = 'scoped memory for _mlpbase_pallas.1']
    #allocation4 [shape = 'u8[16384]{0}', space=vmem, size = 0x4000, scoped, tag = 'input window, operand 1, single buffered']
    #allocation5 [shape = 's32[1]{0}', space=sflag, size = 0x4, scoped, tag = 'scoped memory for _mlpbase_pallas.1']
    #allocation6 [shape = 'u8[65536]{0}', space=vmem, size = 0x10000, scoped, tag = 'input window, operand 2, single buffered']
    #allocation7 [shape = 'u8[2048]{0}', space=vmem, size = 0x800, scoped, tag = 'input window, operand 3, single buffered']
    #allocation8 [shape = 's32[1]{0}', space=sflag, size = 0x4, scoped, tag = 'scoped memory for _mlpbase_pallas.1']
    %9 = vsyncpa [#allocation3], 0
    %10 = vsyncpa [#allocation5], 0
    %11 = vsyncpa [#allocation8], 0
    // Predicated region
    $region2: #{_mlpbase_pallas.1} parent=1 // pred_check
      _
    $region3: #{_mlpbase_pallas.1} parent=1 // pred_check_branch
      %13 = sbr.rel (0) target = $region5
    $region4: #{_mlpbase_pallas.1} parent=1 // pred_region
      %15 = vsyncadd [#allocation3], 0
      %s17 = sshll.u32 %s0, 4
      %s18 = int_to_ptr.hbm [resolvable:$true] %s17
      %s19 = sshll.u32 [#allocation2], 4
      %s20 = int_to_ptr.vmem [resolvable:$true] %s19
      %22 = dma.hbm_to_vmem [thread:$0]  %s18, 128, %s20, [#allocation3]
    $region5: #{_mlpbase_pallas.1} parent=1 // pred_fallthru
      _
    // Predicated region
    $region6: #{_mlpbase_pallas.1} parent=1 // pred_check
      _
    $region7: #{_mlpbase_pallas.1} parent=1 // pred_check_branch
      %24 = sbr.rel (0) target = $region9
    $region8: #{_mlpbase_pallas.1} parent=1 // pred_region
      %26 = vsyncadd [#allocation5], 0
      %s27 = sshll.u32 %s1, 4
      %s28 = int_to_ptr.hbm [resolvable:$true] %s27
      %s29 = sshll.u32 [#allocation4], 4
      %s30 = int_to_ptr.vmem [resolvable:$true] %s29
      %35 = dma.hbm_to_vmem [thread:$0]  %s28, 512, %s30, [#allocation5], 128, 128, 8
    $region9: #{_mlpbase_pallas.1} parent=1 // pred_fallthru
      _
    // Predicated region
    $region10: #{_mlpbase_pallas.1} parent=1 // pred_check
      _
    $region11: #{_mlpbase_pallas.1} parent=1 // pred_check_branch
      %37 = sbr.rel (0) target = $region13
    $region12: #{_mlpbase_pallas.1} parent=1 // pred_region
      %39 = vsyncadd [#allocation5], 0
      %s40 = sshll.u32 %s2, 4
      %s41 = int_to_ptr.hbm [resolvable:$true] %s40
      %s42 = sshll.u32 [#allocation6], 4
      %s43 = int_to_ptr.vmem [resolvable:$true] %s42
      %48 = dma.hbm_to_vmem [thread:$0]  %s41, 2048, %s43, [#allocation5], 128, 128, 8
    $region13: #{_mlpbase_pallas.1} parent=1 // pred_fallthru
      _
    // Predicated region
    $region14: #{_mlpbase_pallas.1} parent=1 // pred_check
      _
    $region15: #{_mlpbase_pallas.1} parent=1 // pred_check_branch
      %50 = sbr.rel (0) target = $region17
    $region16: #{_mlpbase_pallas.1} parent=1 // pred_region
      %52 = vsyncadd [#allocation8], 0
      %s54 = sshll.u32 %s3, 4
      %s55 = int_to_ptr.hbm [resolvable:$true] %s54
      %s56 = sshll.u32 [#allocation7], 4
      %s57 = int_to_ptr.vmem [resolvable:$true] %s56
      %59 = dma.hbm_to_vmem [thread:$0]  %s55, 64, %s57, [#allocation8]
    $region17: #{_mlpbase_pallas.1} parent=1 // pred_fallthru
      _
    // Predicated region
    $region18: #{_mlpbase_pallas.1} parent=1 // pred_check
      _
    $region19: #{_mlpbase_pallas.1} parent=1 // pred_check_branch
      %61 = sbr.rel (0) target = $region21
    $region20: #{_mlpbase_pallas.1} parent=1 // pred_region
      %63 = dma.done [#allocation3], 128
    $region21: #{_mlpbase_pallas.1} parent=1 // pred_fallthru
      _
    // Predicated region
    $region22: #{_mlpbase_pallas.1} parent=1 // pred_check
      _
    $region23: #{_mlpbase_pallas.1} parent=1 // pred_check_branch
      %65 = sbr.rel (0) target = $region25
    $region24: #{_mlpbase_pallas.1} parent=1 // pred_region
      %67 = dma.done [#allocation5], 512
    $region25: #{_mlpbase_pallas.1} parent=1 // pred_fallthru
      _
    // Predicated region
    $region26: #{_mlpbase_pallas.1} parent=1 // pred_check
      _
    $region27: #{_mlpbase_pallas.1} parent=1 // pred_check_branch
      %69 = sbr.rel (0) target = $region29
    $region28: #{_mlpbase_pallas.1} parent=1 // pred_region
      %71 = dma.done [#allocation5], 2048
    $region29: #{_mlpbase_pallas.1} parent=1 // pred_fallthru
      _
    // Predicated region
    $region30: #{_mlpbase_pallas.1} parent=1 // pred_check
      _
    $region31: #{_mlpbase_pallas.1} parent=1 // pred_check_branch
      %73 = sbr.rel (0) target = $region33
    $region32: #{_mlpbase_pallas.1} parent=1 // pred_region
      %75 = dma.done [#allocation8], 64
    $region33: #{_mlpbase_pallas.1} parent=1 // pred_fallthru
      _
    %v76 = vld [vmem:[#allocation2] sm:$0xff]
    %v77 = vld [vmem:[#allocation7] sm:$0x1]
    %v78 = vld [vmem:[#allocation7 + $0x1] sm:$0x1]
    %v79 = vld [vmem:[#allocation7 + $0x2] sm:$0x1]
    %v80 = vld [vmem:[#allocation7 + $0x3] sm:$0x1]
    %v81 = vld [vmem:[#allocation4] sm:$0xff]
    %v82 = vld [vmem:[#allocation4 + $0x8] sm:$0xff]
    %v83 = vld [vmem:[#allocation4 + $0x10] sm:$0xff]
    %v84 = vld [vmem:[#allocation4 + $0x18] sm:$0xff]
    %v85 = vperm.slane %v77, 0
    %vm86 = vcmask 261120
    %v88 = vsel %vm86, %v76, 0
    %90 = vmatpush.msra.mxu0 0.0
    %91 = vmatpush.msra.mxu0 0.0
    %92 = vmatpush.msra.mxu0 0.0
    %93 = vmatpush.msra.mxu0 0.0
    %94 = vmatpush.msra.mxu0 0.0
    %95 = vmatpush.msra.mxu0 0.0
    %96 = vmatpush.msra.mxu0 0.0
    %97 = vmatpush.msra.mxu0 0.0
    %98 = vmatpush.msra.mxu0 0.0
    %99 = vmatpush.msra.mxu0 0.0
    %100 = vmatpush.msra.mxu0 0.0
    %101 = vmatpush.msra.mxu0 0.0
    %102 = vmatpush.msra.mxu0 %v84
    %103 = vmatpush.msra.mxu0 %v83
    %104 = vmatpush.msra.mxu0 %v82
    %105 = vmatpush.msra.mxu0 %v81
    %106 = vmatmul.f32.gmra.mxu0 %v88
    %v107 = vpop.f32.mrf.mxu0
    %v108 = vadd.f32 %v85, %v107
    %109 = vdwg.mxu0
    %v110 = vtanh.pop %v108
    %v111 = vld [vmem:[#allocation6] sm:$0xff]
    %v112 = vld [vmem:[#allocation6 + $0x8] sm:$0xff]
    %v113 = vld [vmem:[#allocation6 + $0x10] sm:$0xff]
    %v114 = vld [vmem:[#allocation6 + $0x18] sm:$0xff]
    %v115 = vld [vmem:[#allocation6 + $0x20] sm:$0xff]
    %v116 = vld [vmem:[#allocation6 + $0x28] sm:$0xff]
    %v117 = vld [vmem:[#allocation6 + $0x30] sm:$0xff]
    %v118 = vld [vmem:[#allocation6 + $0x38] sm:$0xff]
    %v119 = vld [vmem:[#allocation6 + $0x40] sm:$0xff]
    %v120 = vld [vmem:[#allocation6 + $0x48] sm:$0xff]
    %v121 = vld [vmem:[#allocation6 + $0x50] sm:$0xff]
    %v122 = vld [vmem:[#allocation6 + $0x58] sm:$0xff]
    %v123 = vld [vmem:[#allocation6 + $0x60] sm:$0xff]
    %v124 = vld [vmem:[#allocation6 + $0x68] sm:$0xff]
    %v125 = vld [vmem:[#allocation6 + $0x70] sm:$0xff]
    %v126 = vld [vmem:[#allocation6 + $0x78] sm:$0xff]
    %v127 = vperm.slane %v78, 0
    %128 = vmatpush.msra.mxu0 %v126
    %129 = vmatpush.msra.mxu0 %v125
    %130 = vmatpush.msra.mxu0 %v124
    %131 = vmatpush.msra.mxu0 %v123
    %132 = vmatpush.msra.mxu0 %v122
    %133 = vmatpush.msra.mxu0 %v121
    %134 = vmatpush.msra.mxu0 %v120
    %135 = vmatpush.msra.mxu0 %v119
    %136 = vmatpush.msra.mxu0 %v118
    %137 = vmatpush.msra.mxu0 %v117
    %138 = vmatpush.msra.mxu0 %v116
    %139 = vmatpush.msra.mxu0 %v115
    %140 = vmatpush.msra.mxu0 %v114
    %141 = vmatpush.msra.mxu0 %v113
    %142 = vmatpush.msra.mxu0 %v112
    %143 = vmatpush.msra.mxu0 %v111
    %144 = vmatmul.f32.gmra.mxu0 %v110
    %v145 = vpop.f32.mrf.mxu0
    %v146 = vadd.f32 %v127, %v145
    %147 = vdwg.mxu0
    %v148 = vtanh.pop %v146
    %v149 = vperm.slane %v79, 0
    %v150 = vmul.f32 %v148, %v149
    %151 = vadd.xlane.f32.xlu0 %v150
    %v152 = vpop.xlane.xlu0 %151
    %v153 = vperm.slane %v80, 0
    %v154 = vadd.f32 %v152, %v153
    %v155 = vlaneseq
    %v156 = vand.u32 %v155, 127
    %vm157 = vcmp.lt.s32.totalorder %v156, 64
    %159 = vset.pattern.permute.xlu0 0
    %160 = vperm.xlu0 %159, %v154
    %v161 = vpop.permute.xlu0 %160
    %v163 = vsel %vm157, %v148, %v161
    %164 = vst [vmem:[%s4] sm:$0xff] %v163
    // Predicated region
    $region34: #{_mlpbase_pallas.1} parent=1 // pred_check
      _
    $region35: #{_mlpbase_pallas.1} parent=1 // pred_check_branch
      %166 = sbr.rel (0) target = $region37
    $region36: #{_mlpbase_pallas.1} parent=1 // pred_region
      _
    $region37: #{_mlpbase_pallas.1} parent=1 // pred_fallthru
      _
    // Predicated region
    $region38: #{_mlpbase_pallas.1} parent=1 // pred_check
      _
    $region39: #{_mlpbase_pallas.1} parent=1 // pred_check_branch
      %168 = sbr.rel (0) target = $region41
    $region40: #{_mlpbase_pallas.1} parent=1 // pred_region
      _
    $region41: #{_mlpbase_pallas.1} parent=1 // pred_fallthru
      _
    %169 = vsyncpa [#allocation3], 1
    %170 = vsyncpa [#allocation5], 1
    %171 = vsyncpa [#allocation8], 1

</llo_original>
